<compile_context>
chip_gen: v7x
topology: tpu7x:2x2x1
jax: 0.10.0
libtpu: 0.0.40
codegen_flags: <defaults>
</compile_context>

<pallas_src>
import functools

import jax
import jax.numpy as jnp
from jax import lax
from jax.experimental import pallas as pl
from jax.experimental.pallas import tpu as pltpu

D_IN, D_H1, D_H2, D_OUT = 10, 64, 32, 1
SUB_B = 512  # in-kernel batch sub-block (lanes); multiple of the MXU width


def _round_up(x, m):
    return ((x + m - 1) // m) * m


def simple_nn_kernel(x_ref, w1_ref, b1_ref, w2_ref, b2_ref, w3_ref, b3_ref,
                     out_ref, *, sub_b):
    """x_ref: (TB, 10) f32 (native layout); w*: bf16 (out, in);
    b*: f32 (out, 1); out_ref: (1, TB) f32 (batch in lanes, lane-dense)."""
    tb = x_ref.shape[0]
    n_sub = tb // sub_b

    w1 = w1_ref[...]
    w2 = w2_ref[...]
    w3 = w3_ref[...]
    b1 = b1_ref[...]
    b2 = b2_ref[...]
    b3 = b3_ref[...]

    # Statically-unrolled sub-block loop: per-sub-block h1/h2 stay in vregs /
    # small VMEM temps instead of materializing (64,TB)/(32,TB) f32 slabs.
    for j in range(n_sub):
        col = j * sub_b
        xs = x_ref[col:col + sub_b, :].astype(jnp.bfloat16)       # (SB, 10)

        # Layer 1: Linear(10, 64) + ReLU.  The CN transpose of x is folded
        # into the matmul ('oi,bi->ob', contraction over the last dims), so no
        # wrapper-side x.T / extra HBM pass is needed.
        h1 = lax.dot_general(w1, xs, (((1,), (1,)), ((), ())),
                             preferred_element_type=jnp.float32)   # (64, SB)
        h1 = jnp.maximum(h1 + b1, 0.0).astype(jnp.bfloat16)

        # Dropout(0.5): eval-mode identity.
        # TODO(synk): training-mode dropout (pltpu.prng_random_bits mask + 2x
        # scale) is not implemented; eval semantics are used.

        # Layer 2: Linear(64, 32) + ReLU.
        h2 = jnp.dot(w2, h1, preferred_element_type=jnp.float32)   # (32, SB)
        h2 = jnp.maximum(h2 + b2, 0.0).astype(jnp.bfloat16)

        # Layer 3: Linear(32, 1) + Sigmoid.
        h3 = jnp.dot(w3, h2, preferred_element_type=jnp.float32)   # (1, SB)
        h3 = h3 + b3
        # exp + approx reciprocal both issue on the otherwise-idle EUP slot.
        # (Reshaping the (1,SB) slab to (8,SB//8) for the epilogue was skipped:
        #  the relayout cost ~ equals the saved vreg ops at this size.)
        sig = pl.reciprocal(1.0 + jnp.exp(-h3), approx=True)
        out_ref[:, col:col + sub_b] = sig.astype(out_ref.dtype)


@functools.partial(jax.jit, static_argnames=("tile_b",))
def simple_nn_forward(x, params, *, tile_b=16384):
    """x: (B, 10) float32 (native layout, no wrapper transpose).
    params: w* as (out, in), b* as (out, 1).  Returns (B, 1) float32."""
    B = x.shape[0]

    # Tiling: >= 2 grid steps (v7x: both TensorCores get work), an even step
    # count (load balance), tile a multiple of SUB_B, padding kept small.
    n_steps = max(2, pl.cdiv(B, tile_b))
    n_steps += n_steps % 2
    tb = max(SUB_B, _round_up(pl.cdiv(B, n_steps), SUB_B))
    b_pad = n_steps * tb

    if b_pad != B:
        # Only costs an extra pass over x when B isn't already tile-aligned.
        x = jnp.pad(x, ((0, b_pad - B), (0, 0)))

    # Weights in bf16 (single-pass MXU); biases stay f32 for the epilogue.
    w1 = params["w1"].astype(jnp.bfloat16)
    w2 = params["w2"].astype(jnp.bfloat16)
    w3 = params["w3"].astype(jnp.bfloat16)
    b1, b2, b3 = params["b1"], params["b2"], params["b3"]

    n_param_bytes = (2 * (D_IN * D_H1 + D_H1 * D_H2 + D_H2 * D_OUT)
                     + 4 * (D_H1 + D_H2 + D_OUT))
    cost = pl.CostEstimate(
        flops=2 * b_pad * (D_IN * D_H1 + D_H1 * D_H2 + D_H2 * D_OUT),
        transcendentals=2 * b_pad,  # exp + reciprocal per output element
        bytes_accessed=b_pad * 4 * (D_IN + D_OUT) + n_param_bytes,
    )

    const = lambda i: (0, 0)  # weights/biases: single VMEM-resident block
    out = pl.pallas_call(
        functools.partial(simple_nn_kernel, sub_b=SUB_B),
        out_shape=jax.ShapeDtypeStruct((D_OUT, b_pad), jnp.float32),
        grid_spec=pltpu.PrefetchScalarGridSpec(
            num_scalar_prefetch=0,
            grid=(n_steps,),
            in_specs=[
                # x tile in native (B, 10) layout.  If the per-tile fetch ever
                # becomes exposed on v5e, add pipeline_mode=pl.Buffered(3).
                pl.BlockSpec((tb, D_IN), lambda i: (i, 0)),
                pl.BlockSpec((D_H1, D_IN), const),            # w1 (bf16)
                pl.BlockSpec((D_H1, 1), const),               # b1
                pl.BlockSpec((D_H2, D_H1), const),            # w2 (bf16)
                pl.BlockSpec((D_H2, 1), const),               # b2
                pl.BlockSpec((D_OUT, D_H2), const),           # w3 (bf16)
                pl.BlockSpec((D_OUT, 1), const),              # b3
            ],
            out_specs=pl.BlockSpec((D_OUT, tb), lambda i: (0, i)),
        ),
        compiler_params=pltpu.CompilerParams(
            dimension_semantics=("parallel",),
        ),
        cost_estimate=cost,
    )(x, w1, b1, w2, b2, w3, b3)

    return out[:, :B].T  # (B, 1); tiny (4*B bytes) slice+transpose


def init_params(key):
    """Deterministic init mirroring nn.Linear (weights stored (out, in))."""
    k1, k2, k3, k4, k5, k6 = jax.random.split(key, 6)

    def linear_init(kw, kb, fan_in, fan_out):
        # PyTorch default: U(-1/sqrt(fan_in), 1/sqrt(fan_in))
        bound = 1.0 / float(fan_in) ** 0.5
        w = jax.random.uniform(kw, (fan_out, fan_in), jnp.float32, -bound, bound)
        b = jax.random.uniform(kb, (fan_out, 1), jnp.float32, -bound, bound)
        return w, b

    w1, b1 = linear_init(k1, k2, D_IN, D_H1)
    w2, b2 = linear_init(k3, k4, D_H1, D_H2)
    w3, b3 = linear_init(k5, k6, D_H2, D_OUT)
    return {"w1": w1, "b1": b1, "w2": w2, "b2": b2, "w3": w3, "b3": b3}


if __name__ == "__main__":
    key = jax.random.PRNGKey(0)
    pkey, xkey = jax.random.split(key)
    params = init_params(pkey)

    B = 8
    x = jax.random.normal(xkey, (B, D_IN), dtype=jnp.float32)

    out = simple_nn_forward(x, params)
    out = jax.block_until_ready(out)

    # Pure-JAX f32 reference (eval-mode dropout = identity).
    h1 = jnp.maximum(x @ params["w1"].T + params["b1"].T, 0.0)
    h2 = jnp.maximum(h1 @ params["w2"].T + params["b2"].T, 0.0)
    ref = jax.nn.sigmoid(h2 @ params["w3"].T + params["b3"].T)

    assert out.shape == (B, 1)
    # bf16 matmuls (f32 accumulate) + approx-reciprocal sigmoid give ~1e-3
    # level output error vs the pure-f32 reference; allow slack.
    assert jnp.allclose(out, ref, atol=2e-2, rtol=2e-2), (
        float(jnp.max(jnp.abs(out - ref))))

    print("KERNEL_OK")
</pallas_src>

<mosaic_0001>
module attributes {stable_mosaic.version = 11 : i64} {
  func.func @simple_nn_kernel(%arg0: i32, %arg1: memref<512x10xf32, #tpu.memory_space<vmem>>, %arg2: memref<64x10xbf16, #tpu.memory_space<vmem>>, %arg3: memref<64x1xf32, #tpu.memory_space<vmem>>, %arg4: memref<32x64xbf16, #tpu.memory_space<vmem>>, %arg5: memref<32x1xf32, #tpu.memory_space<vmem>>, %arg6: memref<1x32xbf16, #tpu.memory_space<vmem>>, %arg7: memref<1x1xf32, #tpu.memory_space<vmem>>, %arg8: memref<1x512xf32, #tpu.memory_space<vmem>>) attributes {dimension_semantics = [#tpu.dimension_semantics<parallel>], iteration_bounds = array<i64: 2>, scalar_prefetch = 0 : i64, scratch_operands = 0 : i64, tpu.core_type = #tpu.core_type<tc>, window_params = [{transform_indices = @transform_0, window_bounds = array<i64: 512, 10>}, {pipeline_mode = #tpu.pipeline_mode<synchronous>, transform_indices = @transform_1, window_bounds = array<i64: 64, 10>}, {pipeline_mode = #tpu.pipeline_mode<synchronous>, transform_indices = @transform_2, window_bounds = array<i64: 64, 1>}, {pipeline_mode = #tpu.pipeline_mode<synchronous>, transform_indices = @transform_3, window_bounds = array<i64: 32, 64>}, {pipeline_mode = #tpu.pipeline_mode<synchronous>, transform_indices = @transform_4, window_bounds = array<i64: 32, 1>}, {pipeline_mode = #tpu.pipeline_mode<synchronous>, transform_indices = @transform_5, window_bounds = array<i64: 1, 32>}, {pipeline_mode = #tpu.pipeline_mode<synchronous>, transform_indices = @transform_6, window_bounds = array<i64: 1, 1>}, {transform_indices = @transform_7, window_bounds = array<i64: 1, 512>}]} {
    %c0 = arith.constant 0 : index
    %c0_0 = arith.constant 0 : index
    %0 = vector.load %arg2[%c0, %c0_0] : memref<64x10xbf16, #tpu.memory_space<vmem>>, vector<64x10xbf16>
    %c0_1 = arith.constant 0 : index
    %c0_2 = arith.constant 0 : index
    %1 = vector.load %arg4[%c0_1, %c0_2] : memref<32x64xbf16, #tpu.memory_space<vmem>>, vector<32x64xbf16>
    %c0_3 = arith.constant 0 : index
    %c0_4 = arith.constant 0 : index
    %2 = vector.load %arg6[%c0_3, %c0_4] : memref<1x32xbf16, #tpu.memory_space<vmem>>, vector<1x32xbf16>
    %c0_5 = arith.constant 0 : index
    %c0_6 = arith.constant 0 : index
    %3 = vector.load %arg3[%c0_5, %c0_6] : memref<64x1xf32, #tpu.memory_space<vmem>>, vector<64x1xf32>
    %c0_7 = arith.constant 0 : index
    %c0_8 = arith.constant 0 : index
    %4 = vector.load %arg5[%c0_7, %c0_8] : memref<32x1xf32, #tpu.memory_space<vmem>>, vector<32x1xf32>
    %c0_9 = arith.constant 0 : index
    %c0_10 = arith.constant 0 : index
    %5 = vector.load %arg7[%c0_9, %c0_10] : memref<1x1xf32, #tpu.memory_space<vmem>>, vector<1x1xf32>
    %c0_11 = arith.constant 0 : index
    %c0_12 = arith.constant 0 : index
    %6 = vector.load %arg1[%c0_11, %c0_12] : memref<512x10xf32, #tpu.memory_space<vmem>>, vector<512x10xf32>
    %7 = arith.truncf %6 : vector<512x10xf32> to vector<512x10xbf16>
    %cst = arith.constant dense<0.000000e+00> : vector<64x512xf32>
    %8 = tpu.matmul %0, %7, %cst {dimension_numbers = #tpu.dot_dimension_numbers<[1], [1], [0], [0], [0, 0, 1, 0], [], []>} : vector<64x10xbf16>, vector<512x10xbf16>, vector<64x512xf32> -> vector<64x512xf32>
    %9 = vector.broadcast %3 : vector<64x1xf32> to vector<64x512xf32>
    %10 = arith.addf %8, %9 : vector<64x512xf32>
    %cst_13 = arith.constant 0.000000e+00 : f32
    %11 = vector.broadcast %cst_13 : f32 to vector<64x512xf32>
    %12 = arith.maximumf %10, %11 : vector<64x512xf32>
    %13 = arith.truncf %12 : vector<64x512xf32> to vector<64x512xbf16>
    %cst_14 = arith.constant dense<0.000000e+00> : vector<32x512xf32>
    %14 = tpu.matmul %1, %13, %cst_14 {dimension_numbers = #tpu.dot_dimension_numbers<[1], [0], [0], [1], [0, 0, 1, 1], [], []>} : vector<32x64xbf16>, vector<64x512xbf16>, vector<32x512xf32> -> vector<32x512xf32>
    %15 = vector.broadcast %4 : vector<32x1xf32> to vector<32x512xf32>
    %16 = arith.addf %14, %15 : vector<32x512xf32>
    %cst_15 = arith.constant 0.000000e+00 : f32
    %17 = vector.broadcast %cst_15 : f32 to vector<32x512xf32>
    %18 = arith.maximumf %16, %17 : vector<32x512xf32>
    %19 = arith.truncf %18 : vector<32x512xf32> to vector<32x512xbf16>
    %cst_16 = arith.constant dense<0.000000e+00> : vector<1x512xf32>
    %20 = tpu.matmul %2, %19, %cst_16 {dimension_numbers = #tpu.dot_dimension_numbers<[1], [0], [0], [1], [0, 0, 1, 1], [], []>} : vector<1x32xbf16>, vector<32x512xbf16>, vector<1x512xf32> -> vector<1x512xf32>
    %21 = vector.broadcast %5 : vector<1x1xf32> to vector<1x512xf32>
    %22 = arith.addf %20, %21 : vector<1x512xf32>
    %cst_17 = arith.constant 0.000000e+00 : f32
    %23 = vector.broadcast %cst_17 : f32 to vector<1x512xf32>
    %24 = arith.subf %23, %22 : vector<1x512xf32>
    %25 = math.exp %24 : vector<1x512xf32>
    %cst_18 = arith.constant 1.000000e+00 : f32
    %26 = vector.broadcast %cst_18 : f32 to vector<1x512xf32>
    %27 = arith.addf %26, %25 : vector<1x512xf32>
    %28 = tpu.reciprocal %27 {approx = true} : vector<1x512xf32> -> vector<1x512xf32>
    %c0_19 = arith.constant 0 : index
    %c0_20 = arith.constant 0 : index
    %29 = vector.load %arg8[%c0_19, %c0_20] : memref<1x512xf32, #tpu.memory_space<vmem>>, vector<1x512xf32>
    tpu.vector_store %arg8[%c0_19, %c0_20], %28 {strides = array<i32>} : memref<1x512xf32, #tpu.memory_space<vmem>>, vector<1x512xf32>,
    return
  }
  func.func @transform_0(%arg0: i32) -> (i32, i32) {
    %c0_i32 = arith.constant 0 : i32
    %c0_i32_0 = arith.constant 0 : i32
    return %arg0, %c0_i32 : i32, i32
  }
  func.func @transform_1(%arg0: i32) -> (i32, i32) {
    %c0_i32 = arith.constant 0 : i32
    %c0_i32_0 = arith.constant 0 : i32
    %c0_i32_1 = arith.constant 0 : i32
    return %c0_i32, %c0_i32_0 : i32, i32
  }
  func.func @transform_2(%arg0: i32) -> (i32, i32) {
    %c0_i32 = arith.constant 0 : i32
    %c0_i32_0 = arith.constant 0 : i32
    %c0_i32_1 = arith.constant 0 : i32
    return %c0_i32, %c0_i32_0 : i32, i32
  }
  func.func @transform_3(%arg0: i32) -> (i32, i32) {
    %c0_i32 = arith.constant 0 : i32
    %c0_i32_0 = arith.constant 0 : i32
    %c0_i32_1 = arith.constant 0 : i32
    return %c0_i32, %c0_i32_0 : i32, i32
  }
  func.func @transform_4(%arg0: i32) -> (i32, i32) {
    %c0_i32 = arith.constant 0 : i32
    %c0_i32_0 = arith.constant 0 : i32
    %c0_i32_1 = arith.constant 0 : i32
    return %c0_i32, %c0_i32_0 : i32, i32
  }
  func.func @transform_5(%arg0: i32) -> (i32, i32) {
    %c0_i32 = arith.constant 0 : i32
    %c0_i32_0 = arith.constant 0 : i32
    %c0_i32_1 = arith.constant 0 : i32
    return %c0_i32, %c0_i32_0 : i32, i32
  }
  func.func @transform_6(%arg0: i32) -> (i32, i32) {
    %c0_i32 = arith.constant 0 : i32
    %c0_i32_0 = arith.constant 0 : i32
    %c0_i32_1 = arith.constant 0 : i32
    return %c0_i32, %c0_i32_0 : i32, i32
  }
  func.func @transform_7(%arg0: i32) -> (i32, i32) {
    %c0_i32 = arith.constant 0 : i32
    %c0_i32_0 = arith.constant 0 : i32
    return %c0_i32, %arg0 : i32, i32
  }
}

</mosaic_0001>

<llo_original>
// kernel: simple_nn_forward.1
$region0: #{simple_nn_forward.1}
  #allocation0 [shape = 'u32[]', space=smem, size = 0x4, offset = 0x4, fixed_abs, tag = 'smem constant byte address 0x4 - core index']
  #allocation1 [shape = 'u32[144,128]{1,0:T(1,128)}', space=vmem, size = 0x12000, scoped, tag = 'internal scratch']
  #allocation2 [shape = 'f32[1,1]{1,0:T(1,128)S(1)}', space=vmem, size = 0x200, scoped, tag = 'scoped memory for simple_nn_forward.1']
  %s0 = inlined_call_operand.vmem [shape: f32[1024,10], index: 0, kind: input, shape index: {}]
  %s1 = inlined_call_operand.vmem [shape: bf16[64,10], index: 1, kind: input, shape index: {}]
  %s2 = inlined_call_operand.vmem [shape: f32[64,1], index: 2, kind: input, shape index: {}]
  %s3 = inlined_call_operand.vmem [shape: bf16[32,64], index: 3, kind: input, shape index: {}]
  %s4 = inlined_call_operand.vmem [shape: f32[32,1], index: 4, kind: input, shape index: {}]
  %s5 = inlined_call_operand.vmem [shape: bf16[1,32], index: 5, kind: input, shape index: {}]
  %s6 = inlined_call_operand.<no memory space> [shape: f32[1,1], index: 6, kind: input, shape index: {}]
  %s7 = inlined_call_operand.vmem [shape: f32[1,1024], index: 7, kind: output, shape index: {}]
  %s8 = sld [smem:[#allocation0]]
  $region61: #{simple_nn_forward.1} parent=0
    _
  %s10 = ssub.s32 1, %s8
  %s11 = scalar_select 0, %s10, %s8
  %v12 = vstv %s6
  %13 = vst [vmem:[#allocation2] sm:$0x1] %v12
  loop: start=0, step=1, limit=4
  $region2: #{simple_nn_forward.1} parent=0 // loop_pre_header
    _
  $region3: #{simple_nn_forward.1} parent=0 // loop_header
    %s15 = sphi 0, %s19
    %p16 = scmp.ge.s32.totalorder %s15, 4
    %s25 = sphi 0, %s27
    %s28 = sphi 0, %s25
    %s29 = sphi 0, %s28
    %s45 = sphi 0, %s29
    %s49 = sphi 0, %s49
    %s51 = sphi 0, %s49
    %s52 = sphi 0, %s51
    %s66 = sphi 0, %s52
    %s70 = sphi 0, %s70
    %s72 = sphi 0, %s70
    %s73 = sphi 0, %s72
    %s87 = sphi 0, %s73
    %s91 = sphi 0, %s91
    %s93 = sphi 0, %s91
    %s94 = sphi 0, %s93
    %s108 = sphi 0, %s94
    %s112 = sphi 0, %s112
    %s114 = sphi 0, %s112
    %s115 = sphi 0, %s114
    %s129 = sphi 0, %s115
    %s133 = sphi 0, %s133
    %s135 = sphi 0, %s133
    %s136 = sphi 0, %s135
    %s150 = sphi 0, %s136
    %s154 = sphi 0, %s154
    %s156 = sphi 0, %s154
    %s157 = sphi 0, %s156
    %s171 = sphi 0, %s157
    %s177 = sphi 0, %s179
    %s180 = sphi 0, %s177
    %s181 = sphi 0, %s180
    %s197 = sphi 0, %s181
  $region4: #{simple_nn_forward.1} parent=0 // loop_header_branch
    %18 = sbr.rel (%p16) target = $region8
  $region5: #{simple_nn_forward.1} parent=0 // loop_body
    %s20 = ssub.s32 %s15, 1
    %s21 = ssub.s32 %s15, 2
    %s22 = sadd.s32 %s15, 1
    %s23 = ssub.s32 %s15, %s22
    %p24 = scmp.eq.s32.totalorder %s23, 0
    %s26 = sadd.s32 %s25, 1
    %s27 = scalar_select %p24, %s25, %s26
    %p30 = pneg %p24
    %p31 = scmp.eq.s32.totalorder %s15, 1
    %p32 = por %p30, %p31
    %p33 = scmp.ne.s32.totalorder %s25, %s28
    %p34 = scmp.eq.s32.totalorder %s15, 0
    %p35 = por %p33, %p34
    %p36 = scmp.ne.s32.totalorder %s25, %s28
    %p37 = scmp.eq.s32.totalorder %s20, 1
    %p38 = por %p36, %p37
    %p39 = scmp.ne.s32.totalorder %s28, %s29
    %p40 = scmp.eq.s32.totalorder %s20, 0
    %p41 = por %p39, %p40
    %p42 = scmp.ne.s32.totalorder %s28, %s29
    %p43 = scmp.eq.s32.totalorder %s21, 1
    %p44 = por %p42, %p43
    %p46 = scmp.ne.s32.totalorder %s29, %s45
    %p47 = scmp.eq.s32.totalorder %s21, 0
    %p48 = por %p46, %p47
    %s50 = sadd.s32 %s49, 1
    %p53 = scmp.eq.s32.totalorder %s15, 1
    %p54 = scmp.ne.s32.totalorder %s49, %s51
    %p55 = scmp.eq.s32.totalorder %s15, 0
    %p56 = por %p54, %p55
    %p57 = scmp.ne.s32.totalorder %s49, %s51
    %p58 = scmp.eq.s32.totalorder %s20, 1
    %p59 = por %p57, %p58
    %p60 = scmp.ne.s32.totalorder %s51, %s52
    %p61 = scmp.eq.s32.totalorder %s20, 0
    %p62 = por %p60, %p61
    %p63 = scmp.ne.s32.totalorder %s51, %s52
    %p64 = scmp.eq.s32.totalorder %s21, 1
    %p65 = por %p63, %p64
    %p67 = scmp.ne.s32.totalorder %s52, %s66
    %p68 = scmp.eq.s32.totalorder %s21, 0
    %p69 = por %p67, %p68
    %s71 = sadd.s32 %s70, 1
    %p74 = scmp.eq.s32.totalorder %s15, 1
    %p75 = scmp.ne.s32.totalorder %s70, %s72
    %p76 = scmp.eq.s32.totalorder %s15, 0
    %p77 = por %p75, %p76
    %p78 = scmp.ne.s32.totalorder %s70, %s72
    %p79 = scmp.eq.s32.totalorder %s20, 1
    %p80 = por %p78, %p79
    %p81 = scmp.ne.s32.totalorder %s72, %s73
    %p82 = scmp.eq.s32.totalorder %s20, 0
    %p83 = por %p81, %p82
    %p84 = scmp.ne.s32.totalorder %s72, %s73
    %p85 = scmp.eq.s32.totalorder %s21, 1
    %p86 = por %p84, %p85
    %p88 = scmp.ne.s32.totalorder %s73, %s87
    %p89 = scmp.eq.s32.totalorder %s21, 0
    %p90 = por %p88, %p89
    %s92 = sadd.s32 %s91, 1
    %p95 = scmp.eq.s32.totalorder %s15, 1
    %p96 = scmp.ne.s32.totalorder %s91, %s93
    %p97 = scmp.eq.s32.totalorder %s15, 0
    %p98 = por %p96, %p97
    %p99 = scmp.ne.s32.totalorder %s91, %s93
    %p100 = scmp.eq.s32.totalorder %s20, 1
    %p101 = por %p99, %p100
    %p102 = scmp.ne.s32.totalorder %s93, %s94
    %p103 = scmp.eq.s32.totalorder %s20, 0
    %p104 = por %p102, %p103
    %p105 = scmp.ne.s32.totalorder %s93, %s94
    %p106 = scmp.eq.s32.totalorder %s21, 1
    %p107 = por %p105, %p106
    %p109 = scmp.ne.s32.totalorder %s94, %s108
    %p110 = scmp.eq.s32.totalorder %s21, 0
    %p111 = por %p109, %p110
    %s113 = sadd.s32 %s112, 1
    %p116 = scmp.eq.s32.totalorder %s15, 1
    %p117 = scmp.ne.s32.totalorder %s112, %s114
    %p118 = scmp.eq.s32.totalorder %s15, 0
    %p119 = por %p117, %p118
    %p120 = scmp.ne.s32.totalorder %s112, %s114
    %p121 = scmp.eq.s32.totalorder %s20, 1
    %p122 = por %p120, %p121
    %p123 = scmp.ne.s32.totalorder %s114, %s115
    %p124 = scmp.eq.s32.totalorder %s20, 0
    %p125 = por %p123, %p124
    %p126 = scmp.ne.s32.totalorder %s114, %s115
    %p127 = scmp.eq.s32.totalorder %s21, 1
    %p128 = por %p126, %p127
    %p130 = scmp.ne.s32.totalorder %s115, %s129
    %p131 = scmp.eq.s32.totalorder %s21, 0
    %p132 = por %p130, %p131
    %s134 = sadd.s32 %s133, 1
    %p137 = scmp.eq.s32.totalorder %s15, 1
    %p138 = scmp.ne.s32.totalorder %s133, %s135
    %p139 = scmp.eq.s32.totalorder %s15, 0
    %p140 = por %p138, %p139
    %p141 = scmp.ne.s32.totalorder %s133, %s135
    %p142 = scmp.eq.s32.totalorder %s20, 1
    %p143 = por %p141, %p142
    %p144 = scmp.ne.s32.totalorder %s135, %s136
    %p145 = scmp.eq.s32.totalorder %s20, 0
    %p146 = por %p144, %p145
    %p147 = scmp.ne.s32.totalorder %s135, %s136
    %p148 = scmp.eq.s32.totalorder %s21, 1
    %p149 = por %p147, %p148
    %p151 = scmp.ne.s32.totalorder %s136, %s150
    %p152 = scmp.eq.s32.totalorder %s21, 0
    %p153 = por %p151, %p152
    %s155 = sadd.s32 %s154, 1
    %p158 = scmp.eq.s32.totalorder %s15, 1
    %p159 = scmp.ne.s32.totalorder %s154, %s156
    %p160 = scmp.eq.s32.totalorder %s15, 0
    %p161 = por %p159, %p160
    %p162 = scmp.ne.s32.totalorder %s154, %s156
    %p163 = scmp.eq.s32.totalorder %s20, 1
    %p164 = por %p162, %p163
    %p165 = scmp.ne.s32.totalorder %s156, %s157
    %p166 = scmp.eq.s32.totalorder %s20, 0
    %p167 = por %p165, %p166
    %p168 = scmp.ne.s32.totalorder %s156, %s157
    %p169 = scmp.eq.s32.totalorder %s21, 1
    %p170 = por %p168, %p169
    %p172 = scmp.ne.s32.totalorder %s157, %s171
    %p173 = scmp.eq.s32.totalorder %s21, 0
    %p174 = por %p172, %p173
    %s175 = ssub.s32 %s15, %s22
    %p176 = scmp.eq.s32.totalorder %s175, 0
    %s178 = sadd.s32 %s177, 1
    %s179 = scalar_select %p176, %s177, %s178
    %p182 = pneg %p176
    %p183 = scmp.eq.s32.totalorder %s15, 1
    %p184 = por %p182, %p183
    %p185 = scmp.ne.s32.totalorder %s177, %s180
    %p186 = scmp.eq.s32.totalorder %s15, 0
    %p187 = por %p185, %p186
    %p188 = scmp.ne.s32.totalorder %s177, %s180
    %p189 = scmp.eq.s32.totalorder %s20, 1
    %p190 = por %p188, %p189
    %p191 = scmp.ne.s32.totalorder %s180, %s181
    %p192 = scmp.eq.s32.totalorder %s20, 0
    %p193 = por %p191, %p192
    %p194 = scmp.ne.s32.totalorder %s180, %s181
    %p195 = scmp.eq.s32.totalorder %s21, 1
    %p196 = por %p194, %p195
    %p198 = scmp.ne.s32.totalorder %s181, %s197
    %p199 = scmp.eq.s32.totalorder %s21, 0
    %p200 = por %p198, %p199
    %p201 = scmp.le.s32.totalorder 1, %s15
    %p202 = scmp.lt.s32.totalorder %s15, 3
    %p203 = pnand %p201, %p202
    %p204 = pneg %p203
    // Predicated region
    $region9: #{simple_nn_forward.1} parent=5 // pred_check
      _
    $region10: #{simple_nn_forward.1} parent=5 // pred_check_branch
      %206 = sbr.rel (%p203) target = $region12
    $region11: #{simple_nn_forward.1} parent=5 // pred_region
      %s207 = ssub.s32 %s15, 1
      // Predicated region
      $region13: #{simple_nn_forward.1} parent=11 // pred_check
        %p208 = pneg %p62
      $region14: #{simple_nn_forward.1} parent=11 // pred_check_branch
        %210 = sbr.rel (%p208) target = $region16
      $region15: #{simple_nn_forward.1} parent=11 // pred_region
        _
      $region16: #{simple_nn_forward.1} parent=11 // pred_fallthru
        _
      // Predicated region
      $region17: #{simple_nn_forward.1} parent=11 // pred_check
        %p211 = pneg %p83
      $region18: #{simple_nn_forward.1} parent=11 // pred_check_branch
        %213 = sbr.rel (%p211) target = $region20
      $region19: #{simple_nn_forward.1} parent=11 // pred_region
        _
      $region20: #{simple_nn_forward.1} parent=11 // pred_fallthru
        _
      // Predicated region
      $region21: #{simple_nn_forward.1} parent=11 // pred_check
        %p214 = pneg %p104
      $region22: #{simple_nn_forward.1} parent=11 // pred_check_branch
        %216 = sbr.rel (%p214) target = $region24
      $region23: #{simple_nn_forward.1} parent=11 // pred_region
        _
      $region24: #{simple_nn_forward.1} parent=11 // pred_fallthru
        _
      // Predicated region
      $region25: #{simple_nn_forward.1} parent=11 // pred_check
        %p217 = pneg %p125
      $region26: #{simple_nn_forward.1} parent=11 // pred_check_branch
        %219 = sbr.rel (%p217) target = $region28
      $region27: #{simple_nn_forward.1} parent=11 // pred_region
        _
      $region28: #{simple_nn_forward.1} parent=11 // pred_fallthru
        _
      // Predicated region
      $region29: #{simple_nn_forward.1} parent=11 // pred_check
        %p220 = pneg %p146
      $region30: #{simple_nn_forward.1} parent=11 // pred_check_branch
        %222 = sbr.rel (%p220) target = $region32
      $region31: #{simple_nn_forward.1} parent=11 // pred_region
        _
      $region32: #{simple_nn_forward.1} parent=11 // pred_fallthru
        _
      // Predicated region
      $region33: #{simple_nn_forward.1} parent=11 // pred_check
        %p223 = pneg %p167
      $region34: #{simple_nn_forward.1} parent=11 // pred_check_branch
        %225 = sbr.rel (%p223) target = $region36
      $region35: #{simple_nn_forward.1} parent=11 // pred_region
        _
      $region36: #{simple_nn_forward.1} parent=11 // pred_fallthru
        _
    $region12: #{simple_nn_forward.1} parent=5 // pred_fallthru
      _
    %p226 = scmp.lt.s32.totalorder %s15, 2
    // Predicated region
    $region37: #{simple_nn_forward.1} parent=5 // pred_check
      %p227 = pneg %p226
    $region38: #{simple_nn_forward.1} parent=5 // pred_check_branch
      %229 = sbr.rel (%p227) target = $region40
    $region39: #{simple_nn_forward.1} parent=5 // pred_region
      // Predicated region
      $region41: #{simple_nn_forward.1} parent=39 // pred_check
        %p230 = pneg %p35
      $region42: #{simple_nn_forward.1} parent=39 // pred_check_branch
        %232 = sbr.rel (%p230) target = $region44
      $region43: #{simple_nn_forward.1} parent=39 // pred_region
        %s233 = smul.u32 64, %s15
        %p234 = scmp.lt.s32.totalorder %s233, 127
        %s235 = scalar_select %p234, %s233, 127
        %s236 = smul.addr %s235, 8
        %s237 = scalar_lea.vmem %s0, %s236
        %s238 = smul.u32 64, %s15
      $region44: #{simple_nn_forward.1} parent=39 // pred_fallthru
        _
    $region40: #{simple_nn_forward.1} parent=5 // pred_fallthru
      _
    %p239 = scmp.le.s32.totalorder 1, %s15
    %p240 = scmp.lt.s32.totalorder %s15, 3
    %p241 = pnand %p239, %p240
    %p242 = pneg %p241
    // Predicated region
    $region45: #{simple_nn_forward.1} parent=5 // pred_check
      _
    $region46: #{simple_nn_forward.1} parent=5 // pred_check_branch
      %244 = sbr.rel (%p241) target = $region48
    $region47: #{simple_nn_forward.1} parent=5 // pred_region
      %s245 = ssub.s32 %s15, 1
      %s246 = smul.u32 64, %s20
      %p247 = scmp.lt.s32.totalorder %s246, 127
      %s248 = scalar_select %p247, %s246, 127
      %s249 = smul.addr %s248, 8
      %s250 = scalar_lea.vmem %s0, %s249
      %p251 = pneg %p41
      %p252 = pneg %p38
      %p253 = pneg %p62
      %p254 = pneg %p59
      %p255 = pneg %p83
      %p256 = pneg %p80
      %p257 = pneg %p104
      %p258 = pneg %p101
      %p259 = pneg %p125
      %p260 = pneg %p122
      %p261 = pneg %p146
      %p262 = pneg %p143
      %p263 = pneg %p167
      %p264 = pneg %p164
      %p265 = pneg %p193
      %p266 = pneg %p190
      %s267 = smul.u32 4, %s20
      %p268 = scmp.lt.s32.totalorder %s267, 7
      %s269 = scalar_select %p268, %s267, 7
      %s270 = scalar_lea.vmem %s7, %s269
      %s271 = smul.u32 64, %s20
      %p272 = scmp.lt.s32.totalorder %s271, 127
      %s273 = scalar_select %p272, %s271, 127
      %s274 = smul.addr %s273, 8
      %s275 = scalar_lea.vmem %s0, %s274
      %s276 = smul.u32 64, %s20
      %s277 = smul.u32 4, %s20
      %p278 = scmp.lt.s32.totalorder %s277, 7
      %s279 = scalar_select %p278, %s277, 7
      %s280 = scalar_lea.vmem %s7, %s279
      %s281 = smul.u32 4, %s20
      %v283 = vld [vmem:[%s1] sm:$0xf]
      %v284 = vld [vmem:[%s1 + $0x4] sm:$0xf]
      %v285 = vld [vmem:[%s1 + $0x8] sm:$0xf]
      %v286 = vld [vmem:[%s1 + $0xc] sm:$0xf]
      %v287 = vld [vmem:[%s1 + $0x10] sm:$0xf]
      %v288 = vld [vmem:[%s1 + $0x14] sm:$0xf]
      %v289 = vld [vmem:[%s1 + $0x18] sm:$0xf]
      %v290 = vld [vmem:[%s1 + $0x1c] sm:$0xf]
      %v291 = vld [vmem:[%s3] sm:$0xf]
      %v292 = vld [vmem:[%s3 + $0x4] sm:$0xf]
      %v293 = vld [vmem:[%s3 + $0x8] sm:$0xf]
      %v294 = vld [vmem:[%s3 + $0xc] sm:$0xf]
      %v295 = vld [vmem:[%s5] sm:$0x1]
      %v296 = vld [vmem:[%s2] sm:$0xff]
      %v297 = vld [vmem:[%s2 + $0x8] sm:$0xff]
      %v298 = vld [vmem:[%s2 + $0x10] sm:$0xff]
      %v299 = vld [vmem:[%s2 + $0x18] sm:$0xff]
      %v300 = vld [vmem:[%s2 + $0x20] sm:$0xff]
      %v301 = vld [vmem:[%s2 + $0x28] sm:$0xff]
      %v302 = vld [vmem:[%s2 + $0x30] sm:$0xff]
      %v303 = vld [vmem:[%s2 + $0x38] sm:$0xff]
      %v304 = vld [vmem:[%s4] sm:$0xff]
      %v305 = vld [vmem:[%s4 + $0x8] sm:$0xff]
      %v306 = vld [vmem:[%s4 + $0x10] sm:$0xff]
      %v307 = vld [vmem:[%s4 + $0x18] sm:$0xff]
      %v308 = vld [vmem:[#allocation2] sm:$0x1]
      %v309 = vld [vmem:[%s275] sm:$0xff]
      %v310 = vld [vmem:[%s275 + $0x8] sm:$0xff]
      %v311 = vld [vmem:[%s275 + $0x10] sm:$0xff]
      %v312 = vld [vmem:[%s275 + $0x18] sm:$0xff]
      %v313 = vld [vmem:[%s275 + $0x20] sm:$0xff]
      %v314 = vld [vmem:[%s275 + $0x28] sm:$0xff]
      %v315 = vld [vmem:[%s275 + $0x30] sm:$0xff]
      %v316 = vld [vmem:[%s275 + $0x38] sm:$0xff]
      %v317 = vld [vmem:[%s275 + $0x40] sm:$0xff]
      %v318 = vld [vmem:[%s275 + $0x48] sm:$0xff]
      %v319 = vld [vmem:[%s275 + $0x50] sm:$0xff]
      %v320 = vld [vmem:[%s275 + $0x58] sm:$0xff]
      %v321 = vld [vmem:[%s275 + $0x60] sm:$0xff]
      %v322 = vld [vmem:[%s275 + $0x68] sm:$0xff]
      %v323 = vld [vmem:[%s275 + $0x70] sm:$0xff]
      %v324 = vld [vmem:[%s275 + $0x78] sm:$0xff]
      %v325 = vld [vmem:[%s275 + $0x80] sm:$0xff]
      %v326 = vld [vmem:[%s275 + $0x88] sm:$0xff]
      %v327 = vld [vmem:[%s275 + $0x90] sm:$0xff]
      %v328 = vld [vmem:[%s275 + $0x98] sm:$0xff]
      %v329 = vld [vmem:[%s275 + $0xa0] sm:$0xff]
      %v330 = vld [vmem:[%s275 + $0xa8] sm:$0xff]
      %v331 = vld [vmem:[%s275 + $0xb0] sm:$0xff]
      %v332 = vld [vmem:[%s275 + $0xb8] sm:$0xff]
      %v333 = vld [vmem:[%s275 + $0xc0] sm:$0xff]
      %v334 = vld [vmem:[%s275 + $0xc8] sm:$0xff]
      %v335 = vld [vmem:[%s275 + $0xd0] sm:$0xff]
      %v336 = vld [vmem:[%s275 + $0xd8] sm:$0xff]
      %v337 = vld [vmem:[%s275 + $0xe0] sm:$0xff]
      %v338 = vld [vmem:[%s275 + $0xe8] sm:$0xff]
      %v339 = vld [vmem:[%s275 + $0xf0] sm:$0xff]
      %v340 = vld [vmem:[%s275 + $0xf8] sm:$0xff]
      %v341 = vld [vmem:[%s275 + $0x100] sm:$0xff]
      %v342 = vld [vmem:[%s275 + $0x108] sm:$0xff]
      %v343 = vld [vmem:[%s275 + $0x110] sm:$0xff]
      %v344 = vld [vmem:[%s275 + $0x118] sm:$0xff]
      %v345 = vld [vmem:[%s275 + $0x120] sm:$0xff]
      %v346 = vld [vmem:[%s275 + $0x128] sm:$0xff]
      %v347 = vld [vmem:[%s275 + $0x130] sm:$0xff]
      %v348 = vld [vmem:[%s275 + $0x138] sm:$0xff]
      %v349 = vld [vmem:[%s275 + $0x140] sm:$0xff]
      %v350 = vld [vmem:[%s275 + $0x148] sm:$0xff]
      %v351 = vld [vmem:[%s275 + $0x150] sm:$0xff]
      %v352 = vld [vmem:[%s275 + $0x158] sm:$0xff]
      %v353 = vld [vmem:[%s275 + $0x160] sm:$0xff]
      %v354 = vld [vmem:[%s275 + $0x168] sm:$0xff]
      %v355 = vld [vmem:[%s275 + $0x170] sm:$0xff]
      %v356 = vld [vmem:[%s275 + $0x178] sm:$0xff]
      %v357 = vld [vmem:[%s275 + $0x180] sm:$0xff]
      %v358 = vld [vmem:[%s275 + $0x188] sm:$0xff]
      %v359 = vld [vmem:[%s275 + $0x190] sm:$0xff]
      %v360 = vld [vmem:[%s275 + $0x198] sm:$0xff]
      %v361 = vld [vmem:[%s275 + $0x1a0] sm:$0xff]
      %v362 = vld [vmem:[%s275 + $0x1a8] sm:$0xff]
      %v363 = vld [vmem:[%s275 + $0x1b0] sm:$0xff]
      %v364 = vld [vmem:[%s275 + $0x1b8] sm:$0xff]
      %v365 = vld [vmem:[%s275 + $0x1c0] sm:$0xff]
      %v366 = vld [vmem:[%s275 + $0x1c8] sm:$0xff]
      %v367 = vld [vmem:[%s275 + $0x1d0] sm:$0xff]
      %v368 = vld [vmem:[%s275 + $0x1d8] sm:$0xff]
      %v369 = vld [vmem:[%s275 + $0x1e0] sm:$0xff]
      %v370 = vld [vmem:[%s275 + $0x1e8] sm:$0xff]
      %v371 = vld [vmem:[%s275 + $0x1f0] sm:$0xff]
      %v372 = vld [vmem:[%s275 + $0x1f8] sm:$0xff]
      %v373 = vpack.c.bf16 %v310, %v309
      %v374 = vpack.c.bf16 %v312, %v311
      %v375 = vpack.c.bf16 %v314, %v313
      %v376 = vpack.c.bf16 %v316, %v315
      %v377 = vpack.c.bf16 %v318, %v317
      %v378 = vpack.c.bf16 %v320, %v319
      %v379 = vpack.c.bf16 %v322, %v321
      %v380 = vpack.c.bf16 %v324, %v323
      %v381 = vpack.c.bf16 %v326, %v325
      %v382 = vpack.c.bf16 %v328, %v327
      %v383 = vpack.c.bf16 %v330, %v329
      %v384 = vpack.c.bf16 %v332, %v331
      %v385 = vpack.c.bf16 %v334, %v333
      %v386 = vpack.c.bf16 %v336, %v335
      %v387 = vpack.c.bf16 %v338, %v337
      %v388 = vpack.c.bf16 %v340, %v339
      %v389 = vpack.c.bf16 %v342, %v341
      %v390 = vpack.c.bf16 %v344, %v343
      %v391 = vpack.c.bf16 %v346, %v345
      %v392 = vpack.c.bf16 %v348, %v347
      %v393 = vpack.c.bf16 %v350, %v349
      %v394 = vpack.c.bf16 %v352, %v351
      %v395 = vpack.c.bf16 %v354, %v353
      %v396 = vpack.c.bf16 %v356, %v355
      %v397 = vpack.c.bf16 %v358, %v357
      %v398 = vpack.c.bf16 %v360, %v359
      %v399 = vpack.c.bf16 %v362, %v361
      %v400 = vpack.c.bf16 %v364, %v363
      %v401 = vpack.c.bf16 %v366, %v365
      %v402 = vpack.c.bf16 %v368, %v367
      %v403 = vpack.c.bf16 %v370, %v369
      %v404 = vpack.c.bf16 %v372, %v371
      %406 = vset.pattern.permute.xlu0 0
      %407 = vperm.xlu0 %406, %v296
      %v408 = vpop.permute.xlu0 %407
      %411 = vset.pattern.permute.xlu0 0
      %412 = vperm.xlu0 %411, %v297
      %v413 = vpop.permute.xlu0 %412
      %416 = vset.pattern.permute.xlu0 0
      %417 = vperm.xlu0 %416, %v298
      %v418 = vpop.permute.xlu0 %417
      %421 = vset.pattern.permute.xlu0 0
      %422 = vperm.xlu0 %421, %v299
      %v423 = vpop.permute.xlu0 %422
      %426 = vset.pattern.permute.xlu0 0
      %427 = vperm.xlu0 %426, %v300
      %v428 = vpop.permute.xlu0 %427
      %431 = vset.pattern.permute.xlu0 0
      %432 = vperm.xlu0 %431, %v301
      %v433 = vpop.permute.xlu0 %432
      %436 = vset.pattern.permute.xlu0 0
      %437 = vperm.xlu0 %436, %v302
      %v438 = vpop.permute.xlu0 %437
      %441 = vset.pattern.permute.xlu0 0
      %442 = vperm.xlu0 %441, %v303
      %v443 = vpop.permute.xlu0 %442
      %v453 = vunpack.c.l.b16 %v283
      %v454 = vunpack.c.l.b16 %v284
      %v455 = vunpack.c.l.b16 %v285
      %v456 = vunpack.c.l.b16 %v286
      %v457 = vunpack.c.l.b16 %v287
      %v458 = vunpack.c.l.b16 %v288
      %v459 = vunpack.c.l.b16 %v289
      %v460 = vunpack.c.l.b16 %v290
      %v461 = vpack.c.b16 %v454, %v453
      %v462 = vpack.c.b16 %v456, %v455
      %v463 = vpack.c.b16 %v458, %v457
      %v464 = vpack.c.b16 %v460, %v459
      %vm465 = vcmask 80896
      %v467 = vsel %vm465, %v461, 0
      %v470 = vsel %vm465, %v462, 0
      %v473 = vsel %vm465, %v463, 0
      %v476 = vsel %vm465, %v464, 0
      %v479 = vsel %vm465, %v373, 0
      %v482 = vsel %vm465, %v374, 0
      %v485 = vsel %vm465, %v375, 0
      %v488 = vsel %vm465, %v376, 0
      %v491 = vsel %vm465, %v377, 0
      %v494 = vsel %vm465, %v378, 0
      %v497 = vsel %vm465, %v379, 0
      %v500 = vsel %vm465, %v380, 0
      %v503 = vsel %vm465, %v381, 0
      %v506 = vsel %vm465, %v382, 0
      %v509 = vsel %vm465, %v383, 0
      %v512 = vsel %vm465, %v384, 0
      %v515 = vsel %vm465, %v385, 0
      %v518 = vsel %vm465, %v386, 0
      %v521 = vsel %vm465, %v387, 0
      %v524 = vsel %vm465, %v388, 0
      %v527 = vsel %vm465, %v389, 0
      %v530 = vsel %vm465, %v390, 0
      %v533 = vsel %vm465, %v391, 0
      %v536 = vsel %vm465, %v392, 0
      %v539 = vsel %vm465, %v393, 0
      %v542 = vsel %vm465, %v394, 0
      %v545 = vsel %vm465, %v395, 0
      %v548 = vsel %vm465, %v396, 0
      %v551 = vsel %vm465, %v397, 0
      %v554 = vsel %vm465, %v398, 0
      %v557 = vsel %vm465, %v399, 0
      %v560 = vsel %vm465, %v400, 0
      %v563 = vsel %vm465, %v401, 0
      %v566 = vsel %vm465, %v402, 0
      %v569 = vsel %vm465, %v403, 0
      %v572 = vsel %vm465, %v404, 0
      %574 = vmatprep.subr.bf16.mxu0 0
      %575 = vmatpush1.bf16.xpose.msra.mxu0 %v479
      %576 = vmatprep.subr.bf16.mxu0 0
      %577 = vmatpush1.bf16.xpose.msra.mxu0 %v482
      %578 = vmatprep.subr.bf16.mxu0 0
      %579 = vmatpush1.bf16.xpose.msra.mxu0 %v485
      %580 = vmatprep.subr.bf16.mxu0 0
      %581 = vmatpush1.bf16.xpose.msra.mxu0 %v488
      %582 = vmatprep.subr.bf16.mxu0 0
      %583 = vmatpush1.bf16.xpose.msra.mxu0 %v491
      %584 = vmatprep.subr.bf16.mxu0 0
      %585 = vmatpush1.bf16.xpose.msra.mxu0 %v494
      %586 = vmatprep.subr.bf16.mxu0 0
      %587 = vmatpush1.bf16.xpose.msra.mxu0 %v497
      %588 = vmatprep.subr.bf16.mxu0 0
      %589 = vmatpush1.bf16.xpose.msra.mxu0 %v500
      %590 = vmatprep.subr.bf16.mxu0 0
      %591 = vmatpush1.bf16.xpose.msra.mxu0 %v503
      %592 = vmatprep.subr.bf16.mxu0 0
      %593 = vmatpush1.bf16.xpose.msra.mxu0 %v506
      %594 = vmatprep.subr.bf16.mxu0 0
      %595 = vmatpush1.bf16.xpose.msra.mxu0 %v509
      %596 = vmatprep.subr.bf16.mxu0 0
      %597 = vmatpush1.bf16.xpose.msra.mxu0 %v512
      %598 = vmatprep.subr.bf16.mxu0 0
      %599 = vmatpush1.bf16.xpose.msra.mxu0 %v515
      %600 = vmatprep.subr.bf16.mxu0 0
      %601 = vmatpush1.bf16.xpose.msra.mxu0 %v518
      %602 = vmatprep.subr.bf16.mxu0 0
      %603 = vmatpush1.bf16.xpose.msra.mxu0 %v521
      %604 = vmatprep.subr.bf16.mxu0 0
      %605 = vmatpush1.bf16.xpose.msra.mxu0 %v524
      %606 = vmatprep.mubr.bf16.mxu0 0
      %607 = vmatmul.mubr.bf16.gmra.mrb[0].mxu0 %v467
      %v608 = vpop.f32.mrb[0].mxu0
      %v609 = vadd.f32 %v408, %v608
      %v610 = vpop.f32.mrb[0].mxu0
      %v611 = vadd.f32 %v408, %v610
      %v612 = vpop.f32.mrb[0].mxu0
      %v613 = vadd.f32 %v413, %v612
      %v614 = vpop.f32.mrb[0].mxu0
      %v615 = vadd.f32 %v413, %v614
      %616 = vmatprep.mubr.bf16.mxu0 0
      %617 = vmatmul.mubr.bf16.gmra.mrb[0].mxu0 %v470
      %v618 = vpop.f32.mrb[0].mxu0
      %v619 = vadd.f32 %v418, %v618
      %v620 = vpop.f32.mrb[0].mxu0
      %v621 = vadd.f32 %v418, %v620
      %v622 = vpop.f32.mrb[0].mxu0
      %v623 = vadd.f32 %v423, %v622
      %v624 = vpop.f32.mrb[0].mxu0
      %v625 = vadd.f32 %v423, %v624
      %626 = vmatprep.mubr.bf16.mxu0 0
      %627 = vmatmul.mubr.bf16.gmra.mrb[0].mxu0 %v473
      %v628 = vpop.f32.mrb[0].mxu0
      %v629 = vadd.f32 %v428, %v628
      %v630 = vpop.f32.mrb[0].mxu0
      %v631 = vadd.f32 %v428, %v630
      %v632 = vpop.f32.mrb[0].mxu0
      %v633 = vadd.f32 %v433, %v632
      %v634 = vpop.f32.mrb[0].mxu0
      %v635 = vadd.f32 %v433, %v634
      %636 = vmatprep.mubr.bf16.mxu0 0
      %637 = vmatmul.mubr.bf16.gmra.mrb[0].mxu0 %v476
      %v638 = vpop.f32.mrb[0].mxu0
      %v639 = vadd.f32 %v438, %v638
      %v640 = vpop.f32.mrb[0].mxu0
      %v641 = vadd.f32 %v438, %v640
      %v642 = vpop.f32.mrb[0].mxu0
      %v643 = vadd.f32 %v443, %v642
      %v644 = vpop.f32.mrb[0].mxu0
      %v645 = vadd.f32 %v443, %v644
      %646 = vdwg.mxu0
      %647 = vmatprep.subr.bf16.mxu0 0
      %648 = vmatpush1.bf16.xpose.msra.mxu0 %v527
      %649 = vmatprep.subr.bf16.mxu0 0
      %650 = vmatpush1.bf16.xpose.msra.mxu0 %v530
      %651 = vmatprep.subr.bf16.mxu0 0
      %652 = vmatpush1.bf16.xpose.msra.mxu0 %v533
      %653 = vmatprep.subr.bf16.mxu0 0
      %654 = vmatpush1.bf16.xpose.msra.mxu0 %v536
      %655 = vmatprep.subr.bf16.mxu0 0
      %656 = vmatpush1.bf16.xpose.msra.mxu0 %v539
      %657 = vmatprep.subr.bf16.mxu0 0
      %658 = vmatpush1.bf16.xpose.msra.mxu0 %v542
      %659 = vmatprep.subr.bf16.mxu0 0
      %660 = vmatpush1.bf16.xpose.msra.mxu0 %v545
      %661 = vmatprep.subr.bf16.mxu0 0
      %662 = vmatpush1.bf16.xpose.msra.mxu0 %v548
      %663 = vmatprep.subr.bf16.mxu0 0
      %664 = vmatpush1.bf16.xpose.msra.mxu0 %v551
      %665 = vmatprep.subr.bf16.mxu0 0
      %666 = vmatpush1.bf16.xpose.msra.mxu0 %v554
      %667 = vmatprep.subr.bf16.mxu0 0
      %668 = vmatpush1.bf16.xpose.msra.mxu0 %v557
      %669 = vmatprep.subr.bf16.mxu0 0
      %670 = vmatpush1.bf16.xpose.msra.mxu0 %v560
      %671 = vmatprep.subr.bf16.mxu0 0
      %672 = vmatpush1.bf16.xpose.msra.mxu0 %v563
      %673 = vmatprep.subr.bf16.mxu0 0
      %674 = vmatpush1.bf16.xpose.msra.mxu0 %v566
      %675 = vmatprep.subr.bf16.mxu0 0
      %676 = vmatpush1.bf16.xpose.msra.mxu0 %v569
      %677 = vmatprep.subr.bf16.mxu0 0
      %678 = vmatpush1.bf16.xpose.msra.mxu0 %v572
      %679 = vmatprep.mubr.bf16.mxu0 0
      %680 = vmatmul.mubr.bf16.gmra.mrb[0].mxu0 %v467
      %v681 = vpop.f32.mrb[0].mxu0
      %v682 = vadd.f32 %v408, %v681
      %v683 = vpop.f32.mrb[0].mxu0
      %v684 = vadd.f32 %v408, %v683
      %v685 = vpop.f32.mrb[0].mxu0
      %v686 = vadd.f32 %v413, %v685
      %v687 = vpop.f32.mrb[0].mxu0
      %v688 = vadd.f32 %v413, %v687
      %689 = vmatprep.mubr.bf16.mxu0 0
      %690 = vmatmul.mubr.bf16.gmra.mrb[0].mxu0 %v470
      %v691 = vpop.f32.mrb[0].mxu0
      %v692 = vadd.f32 %v418, %v691
      %v693 = vpop.f32.mrb[0].mxu0
      %v694 = vadd.f32 %v418, %v693
      %v695 = vpop.f32.mrb[0].mxu0
      %v696 = vadd.f32 %v423, %v695
      %v697 = vpop.f32.mrb[0].mxu0
      %v698 = vadd.f32 %v423, %v697
      %699 = vmatprep.mubr.bf16.mxu0 0
      %700 = vmatmul.mubr.bf16.gmra.mrb[0].mxu0 %v473
      %v701 = vpop.f32.mrb[0].mxu0
      %v702 = vadd.f32 %v428, %v701
      %v703 = vpop.f32.mrb[0].mxu0
      %v704 = vadd.f32 %v428, %v703
      %v705 = vpop.f32.mrb[0].mxu0
      %v706 = vadd.f32 %v433, %v705
      %v707 = vpop.f32.mrb[0].mxu0
      %v708 = vadd.f32 %v433, %v707
      %709 = vmatprep.mubr.bf16.mxu0 0
      %710 = vmatmul.mubr.bf16.gmra.mrb[0].mxu0 %v476
      %v711 = vpop.f32.mrb[0].mxu0
      %v712 = vadd.f32 %v438, %v711
      %v713 = vpop.f32.mrb[0].mxu0
      %v714 = vadd.f32 %v438, %v713
      %v715 = vpop.f32.mrb[0].mxu0
      %v716 = vadd.f32 %v443, %v715
      %v717 = vpop.f32.mrb[0].mxu0
      %v718 = vadd.f32 %v443, %v717
      %719 = vdwg.mxu0
      %v720 = vmax.f32 %v609, 0.0
      %v721 = vmax.f32 %v611, 0.0
      %v722 = vmax.f32 %v682, 0.0
      %v723 = vmax.f32 %v684, 0.0
      %v724 = vmax.f32 %v613, 0.0
      %v725 = vmax.f32 %v615, 0.0
      %v726 = vmax.f32 %v686, 0.0
      %v727 = vmax.f32 %v688, 0.0
      %v728 = vmax.f32 %v619, 0.0
      %v729 = vmax.f32 %v621, 0.0
      %v730 = vmax.f32 %v692, 0.0
      %v731 = vmax.f32 %v694, 0.0
      %v732 = vmax.f32 %v623, 0.0
      %v733 = vmax.f32 %v625, 0.0
      %v734 = vmax.f32 %v696, 0.0
      %v735 = vmax.f32 %v698, 0.0
      %v736 = vmax.f32 %v629, 0.0
      %v737 = vmax.f32 %v631, 0.0
      %v738 = vmax.f32 %v702, 0.0
      %v739 = vmax.f32 %v704, 0.0
      %v740 = vmax.f32 %v633, 0.0
      %v741 = vmax.f32 %v635, 0.0
      %v742 = vmax.f32 %v706, 0.0
      %v743 = vmax.f32 %v708, 0.0
      %v744 = vmax.f32 %v639, 0.0
      %v745 = vmax.f32 %v641, 0.0
      %v746 = vmax.f32 %v712, 0.0
      %v747 = vmax.f32 %v714, 0.0
      %v748 = vmax.f32 %v643, 0.0
      %v749 = vmax.f32 %v645, 0.0
      %v750 = vmax.f32 %v716, 0.0
      %v751 = vmax.f32 %v718, 0.0
      %v752 = vpack.c.bf16 %v724, %v720
      %v753 = vpack.c.bf16 %v725, %v721
      %v754 = vpack.c.bf16 %v726, %v722
      %v755 = vpack.c.bf16 %v727, %v723
      %v756 = vpack.c.bf16 %v732, %v728
      %v757 = vpack.c.bf16 %v733, %v729
      %v758 = vpack.c.bf16 %v734, %v730
      %v759 = vpack.c.bf16 %v735, %v731
      %v760 = vpack.c.bf16 %v740, %v736
      %v761 = vpack.c.bf16 %v741, %v737
      %v762 = vpack.c.bf16 %v742, %v738
      %v763 = vpack.c.bf16 %v743, %v739
      %v764 = vpack.c.bf16 %v748, %v744
      %v765 = vpack.c.bf16 %v749, %v745
      %v766 = vpack.c.bf16 %v750, %v746
      %v767 = vpack.c.bf16 %v751, %v747
      %769 = vset.pattern.permute.xlu0 0
      %770 = vperm.xlu0 %769, %v304
      %v771 = vpop.permute.xlu0 %770
      %774 = vset.pattern.permute.xlu0 0
      %775 = vperm.xlu0 %774, %v305
      %v776 = vpop.permute.xlu0 %775
      %779 = vset.pattern.permute.xlu0 0
      %780 = vperm.xlu0 %779, %v306
      %v781 = vpop.permute.xlu0 %780
      %784 = vset.pattern.permute.xlu0 0
      %785 = vperm.xlu0 %784, %v307
      %v786 = vpop.permute.xlu0 %785
      %v792 = vunpack.c.l.b16 %v291
      %v793 = vunpack.c.l.b16 %v292
      %v794 = vunpack.c.l.b16 %v293
      %v795 = vunpack.c.l.b16 %v294
      %v796 = vpack.c.b16 %v793, %v792
      %v797 = vpack.c.b16 %v795, %v794
      %vm798 = vcmask 523264
      %v800 = vsel %vm798, %v796, 0
      %v803 = vsel %vm798, %v797, 0
      %805 = vmatprep.subr.bf16.mxu0 %v753
      %806 = vmatpush1.bf16.msra.mxu0 %v752
      %807 = vmatprep.subr.bf16.mxu0 %v757
      %808 = vmatpush1.bf16.msra.mxu0 %v756
      %809 = vmatprep.subr.bf16.mxu0 %v761
      %810 = vmatpush1.bf16.msra.mxu0 %v760
      %811 = vmatprep.subr.bf16.mxu0 %v765
      %812 = vmatpush1.bf16.msra.mxu0 %v764
      %813 = vmatprep.subr.bf16.mxu0 0
      %814 = vmatpush1.bf16.msra.mxu0 0
      %815 = vmatprep.subr.bf16.mxu0 0
      %816 = vmatpush1.bf16.msra.mxu0 0
      %817 = vmatprep.subr.bf16.mxu0 0
      %818 = vmatpush1.bf16.msra.mxu0 0
      %819 = vmatprep.subr.bf16.mxu0 0
      %820 = vmatpush1.bf16.msra.mxu0 0
      %821 = vmatprep.subr.bf16.mxu0 0
      %822 = vmatpush1.bf16.msra.mxu0 0
      %823 = vmatprep.subr.bf16.mxu0 0
      %824 = vmatpush1.bf16.msra.mxu0 0
      %825 = vmatprep.subr.bf16.mxu0 0
      %826 = vmatpush1.bf16.msra.mxu0 0
      %827 = vmatprep.subr.bf16.mxu0 0
      %828 = vmatpush1.bf16.msra.mxu0 0
      %829 = vmatprep.subr.bf16.mxu0 0
      %830 = vmatpush1.bf16.msra.mxu0 0
      %831 = vmatprep.subr.bf16.mxu0 0
      %832 = vmatpush1.bf16.msra.mxu0 0
      %833 = vmatprep.subr.bf16.mxu0 0
      %834 = vmatpush1.bf16.msra.mxu0 0
      %835 = vmatprep.subr.bf16.mxu0 0
      %836 = vmatpush1.bf16.msra.mxu0 0
      %837 = vmatprep.mubr.bf16.mxu0 0
      %838 = vmatmul.mubr.bf16.gmra.mrb[0].mxu0 %v800
      %v839 = vpop.f32.mrb[0].mxu0
      %v840 = vadd.f32 %v771, %v839
      %v841 = vpop.f32.mrb[0].mxu0
      %v842 = vadd.f32 %v771, %v841
      %v843 = vpop.f32.mrb[0].mxu0
      %v844 = vadd.f32 %v776, %v843
      %v845 = vpop.f32.mrb[0].mxu0
      %v846 = vadd.f32 %v776, %v845
      %847 = vmatprep.mubr.bf16.mxu0 0
      %848 = vmatmul.mubr.bf16.gmra.mrb[0].mxu0 %v803
      %v849 = vpop.f32.mrb[0].mxu0
      %v850 = vadd.f32 %v781, %v849
      %v851 = vpop.f32.mrb[0].mxu0
      %v852 = vadd.f32 %v781, %v851
      %v853 = vpop.f32.mrb[0].mxu0
      %v854 = vadd.f32 %v786, %v853
      %v855 = vpop.f32.mrb[0].mxu0
      %v856 = vadd.f32 %v786, %v855
      %857 = vdwg.mxu0
      %858 = vmatprep.subr.bf16.mxu0 %v755
      %859 = vmatpush1.bf16.msra.mxu0 %v754
      %860 = vmatprep.subr.bf16.mxu0 %v759
      %861 = vmatpush1.bf16.msra.mxu0 %v758
      %862 = vmatprep.subr.bf16.mxu0 %v763
      %863 = vmatpush1.bf16.msra.mxu0 %v762
      %864 = vmatprep.subr.bf16.mxu0 %v767
      %865 = vmatpush1.bf16.msra.mxu0 %v766
      %866 = vmatprep.subr.bf16.mxu0 0
      %867 = vmatpush1.bf16.msra.mxu0 0
      %868 = vmatprep.subr.bf16.mxu0 0
      %869 = vmatpush1.bf16.msra.mxu0 0
      %870 = vmatprep.subr.bf16.mxu0 0
      %871 = vmatpush1.bf16.msra.mxu0 0
      %872 = vmatprep.subr.bf16.mxu0 0
      %873 = vmatpush1.bf16.msra.mxu0 0
      %874 = vmatprep.subr.bf16.mxu0 0
      %875 = vmatpush1.bf16.msra.mxu0 0
      %876 = vmatprep.subr.bf16.mxu0 0
      %877 = vmatpush1.bf16.msra.mxu0 0
      %878 = vmatprep.subr.bf16.mxu0 0
      %879 = vmatpush1.bf16.msra.mxu0 0
      %880 = vmatprep.subr.bf16.mxu0 0
      %881 = vmatpush1.bf16.msra.mxu0 0
      %882 = vmatprep.subr.bf16.mxu0 0
      %883 = vmatpush1.bf16.msra.mxu0 0
      %884 = vmatprep.subr.bf16.mxu0 0
      %885 = vmatpush1.bf16.msra.mxu0 0
      %886 = vmatprep.subr.bf16.mxu0 0
      %887 = vmatpush1.bf16.msra.mxu0 0
      %888 = vmatprep.subr.bf16.mxu0 0
      %889 = vmatpush1.bf16.msra.mxu0 0
      %890 = vmatprep.mubr.bf16.mxu0 0
      %891 = vmatmul.mubr.bf16.gmra.mrb[0].mxu0 %v800
      %v892 = vpop.f32.mrb[0].mxu0
      %v893 = vadd.f32 %v771, %v892
      %v894 = vpop.f32.mrb[0].mxu0
      %v895 = vadd.f32 %v771, %v894
      %v896 = vpop.f32.mrb[0].mxu0
      %v897 = vadd.f32 %v776, %v896
      %v898 = vpop.f32.mrb[0].mxu0
      %v899 = vadd.f32 %v776, %v898
      %900 = vmatprep.mubr.bf16.mxu0 0
      %901 = vmatmul.mubr.bf16.gmra.mrb[0].mxu0 %v803
      %v902 = vpop.f32.mrb[0].mxu0
      %v903 = vadd.f32 %v781, %v902
      %v904 = vpop.f32.mrb[0].mxu0
      %v905 = vadd.f32 %v781, %v904
      %v906 = vpop.f32.mrb[0].mxu0
      %v907 = vadd.f32 %v786, %v906
      %v908 = vpop.f32.mrb[0].mxu0
      %v909 = vadd.f32 %v786, %v908
      %910 = vdwg.mxu0
      %v911 = vmax.f32 %v840, 0.0
      %v912 = vmax.f32 %v842, 0.0
      %v913 = vmax.f32 %v893, 0.0
      %v914 = vmax.f32 %v895, 0.0
      %v915 = vmax.f32 %v844, 0.0
      %v916 = vmax.f32 %v846, 0.0
      %v917 = vmax.f32 %v897, 0.0
      %v918 = vmax.f32 %v899, 0.0
      %v919 = vmax.f32 %v850, 0.0
      %v920 = vmax.f32 %v852, 0.0
      %v921 = vmax.f32 %v903, 0.0
      %v922 = vmax.f32 %v905, 0.0
      %v923 = vmax.f32 %v854, 0.0
      %v924 = vmax.f32 %v856, 0.0
      %v925 = vmax.f32 %v907, 0.0
      %v926 = vmax.f32 %v909, 0.0
      %v927 = vpack.c.bf16 %v915, %v911
      %v928 = vpack.c.bf16 %v916, %v912
      %v929 = vpack.c.bf16 %v917, %v913
      %v930 = vpack.c.bf16 %v918, %v914
      %v931 = vpack.c.bf16 %v923, %v919
      %v932 = vpack.c.bf16 %v924, %v920
      %v933 = vpack.c.bf16 %v925, %v921
      %v934 = vpack.c.bf16 %v926, %v922
      %936 = vset.pattern.permute.xlu0 0
      %937 = vperm.xlu0 %936, %v308
      %v938 = vpop.permute.xlu0 %937
      %v940 = vlaneseq
      %v941 = vshrl.u32 %v940, 7
      %v942 = vsub.s32 0, %v941
      %v943 = vrot.slane %v938, %v942
      %vm944 = vcmask 261120
      %v946 = vsel %vm944, %v295, 0
      %948 = vmatprep.subr.bf16.mxu0 %v928
      %949 = vmatpush1.bf16.msra.mxu0 %v927
      %950 = vmatprep.subr.bf16.mxu0 %v932
      %951 = vmatpush1.bf16.msra.mxu0 %v931
      %952 = vmatprep.subr.bf16.mxu0 0
      %953 = vmatpush1.bf16.msra.mxu0 0
      %954 = vmatprep.subr.bf16.mxu0 0
      %955 = vmatpush1.bf16.msra.mxu0 0
      %956 = vmatprep.subr.bf16.mxu0 0
      %957 = vmatpush1.bf16.msra.mxu0 0
      %958 = vmatprep.subr.bf16.mxu0 0
      %959 = vmatpush1.bf16.msra.mxu0 0
      %960 = vmatprep.subr.bf16.mxu0 0
      %961 = vmatpush1.bf16.msra.mxu0 0
      %962 = vmatprep.subr.bf16.mxu0 0
      %963 = vmatpush1.bf16.msra.mxu0 0
      %964 = vmatprep.subr.bf16.mxu0 0
      %965 = vmatpush1.bf16.msra.mxu0 0
      %966 = vmatprep.subr.bf16.mxu0 0
      %967 = vmatpush1.bf16.msra.mxu0 0
      %968 = vmatprep.subr.bf16.mxu0 0
      %969 = vmatpush1.bf16.msra.mxu0 0
      %970 = vmatprep.subr.bf16.mxu0 0
      %971 = vmatpush1.bf16.msra.mxu0 0
      %972 = vmatprep.subr.bf16.mxu0 0
      %973 = vmatpush1.bf16.msra.mxu0 0
      %974 = vmatprep.subr.bf16.mxu0 0
      %975 = vmatpush1.bf16.msra.mxu0 0
      %976 = vmatprep.subr.bf16.mxu0 0
      %977 = vmatpush1.bf16.msra.mxu0 0
      %978 = vmatprep.subr.bf16.mxu0 0
      %979 = vmatpush1.bf16.msra.mxu0 0
      %980 = vmatprep.mubr.bf16.mxu0 0
      %981 = vmatmul.mubr.bf16.gmra.mrb[0].mxu0 %v946
      %v982 = vpop.f32.mrb[0].mxu0
      %v983 = vadd.f32 %v943, %v982
      %v984 = vpop.f32.mrb[0].mxu0
      %v985 = vadd.f32 %v943, %v984
      %v986 = vpop.f32.mrb[0].mxu0
      %v987 = vpop.f32.mrb[0].mxu0
      %988 = vdwg.mxu0
      %989 = vmatprep.subr.bf16.mxu0 %v930
      %990 = vmatpush1.bf16.msra.mxu0 %v929
      %991 = vmatprep.subr.bf16.mxu0 %v934
      %992 = vmatpush1.bf16.msra.mxu0 %v933
      %993 = vmatprep.subr.bf16.mxu0 0
      %994 = vmatpush1.bf16.msra.mxu0 0
      %995 = vmatprep.subr.bf16.mxu0 0
      %996 = vmatpush1.bf16.msra.mxu0 0
      %997 = vmatprep.subr.bf16.mxu0 0
      %998 = vmatpush1.bf16.msra.mxu0 0
      %999 = vmatprep.subr.bf16.mxu0 0
      %1000 = vmatpush1.bf16.msra.mxu0 0
      %1001 = vmatprep.subr.bf16.mxu0 0
      %1002 = vmatpush1.bf16.msra.mxu0 0
      %1003 = vmatprep.subr.bf16.mxu0 0
      %1004 = vmatpush1.bf16.msra.mxu0 0
      %1005 = vmatprep.subr.bf16.mxu0 0
      %1006 = vmatpush1.bf16.msra.mxu0 0
      %1007 = vmatprep.subr.bf16.mxu0 0
      %1008 = vmatpush1.bf16.msra.mxu0 0
      %1009 = vmatprep.subr.bf16.mxu0 0
      %1010 = vmatpush1.bf16.msra.mxu0 0
      %1011 = vmatprep.subr.bf16.mxu0 0
      %1012 = vmatpush1.bf16.msra.mxu0 0
      %1013 = vmatprep.subr.bf16.mxu0 0
      %1014 = vmatpush1.bf16.msra.mxu0 0
      %1015 = vmatprep.subr.bf16.mxu0 0
      %1016 = vmatpush1.bf16.msra.mxu0 0
      %1017 = vmatprep.subr.bf16.mxu0 0
      %1018 = vmatpush1.bf16.msra.mxu0 0
      %1019 = vmatprep.subr.bf16.mxu0 0
      %1020 = vmatpush1.bf16.msra.mxu0 0
      %1021 = vmatprep.mubr.bf16.mxu0 0
      %1022 = vmatmul.mubr.bf16.gmra.mrb[0].mxu0 %v946
      %v1023 = vpop.f32.mrb[0].mxu0
      %v1024 = vadd.f32 %v943, %v1023
      %v1025 = vpop.f32.mrb[0].mxu0
      %v1026 = vadd.f32 %v943, %v1025
      %v1027 = vpop.f32.mrb[0].mxu0
      %v1028 = vpop.f32.mrb[0].mxu0
      %1029 = vdwg.mxu0
      %v1030 = vsub.f32 0.0, %v983
      %v1031 = vsub.f32 0.0, %v985
      %v1032 = vsub.f32 0.0, %v1024
      %v1033 = vsub.f32 0.0, %v1026
      %v1034 = vmul.f32 %v1030, 1.442695
      %v1035 = vpow.pop %v1034
      %v1036 = vmul.f32 %v1031, 1.442695
      %v1037 = vpow.pop %v1036
      %v1038 = vmul.f32 %v1032, 1.442695
      %v1039 = vpow.pop %v1038
      %v1040 = vmul.f32 %v1033, 1.442695
      %v1041 = vpow.pop %v1040
      %v1042 = vadd.f32 %v1035, 1.0
      %v1043 = vadd.f32 %v1037, 1.0
      %v1044 = vadd.f32 %v1039, 1.0
      %v1045 = vadd.f32 %v1041, 1.0
      %v1046 = vrcp.pop %v1042
      %v1047 = vrcp.pop %v1043
      %v1048 = vrcp.pop %v1044
      %v1049 = vrcp.pop %v1045
      %v1054 = vcombine.low %v1046, %v1047
      %v1055 = vcombine.low %v1048, %v1049
      %v1057 = vunpack.c.l.s4 1966171168
      %v1058 = vunpack.c.0.s8 %v1057
      %v1059 = vlaneseq
      %v1060 = vshrl.u32 %v1059, 7
      %v1061 = vsub.s32 %v1058, %v1060
      %v1062 = vrot.slane %v1054, %v1061
      %v1064 = vunpack.c.l.s4 1966171168
      %v1065 = vunpack.c.0.s8 %v1064
      %v1066 = vlaneseq
      %v1067 = vshrl.u32 %v1066, 7
      %v1068 = vsub.s32 %v1065, %v1067
      %v1069 = vrot.slane %v1055, %v1068
      %v1070 = vcombine.low %v1062, %v1069
      %v1072 = vunpack.c.l.s4 1966171168
      %v1073 = vunpack.c.0.s8 %v1072
      %v1074 = vlaneseq
      %v1075 = vshrl.u32 %v1074, 7
      %v1076 = vsub.s32 %v1073, %v1075
      %v1077 = vrot.slane %v1070, %v1076
      %v1079 = vlaneseq
      %vm1080 = vcmp.ge.s32.totalorder %v1079, 0
      %vm1081 = vcmp.lt.s32.totalorder %v1079, 512
      %vm1082 = vmand %vm1080, %vm1081
      %1083 = vst.msk [vmem:[%s280] sm:$0xf] %vm1082, %v1077
      %s1084 = smul.u32 4, %s20
      %p1085 = scmp.lt.s32.totalorder %s1084, 7
      %s1086 = scalar_select %p1085, %s1084, 7
      %s1087 = scalar_lea.vmem %s7, %s1086
      // Predicated region
      $region49: #{simple_nn_forward.1} parent=47 // pred_check
        %p1088 = pneg %p190
      $region50: #{simple_nn_forward.1} parent=47 // pred_check_branch
        %1090 = sbr.rel (%p1088) target = $region52
      $region51: #{simple_nn_forward.1} parent=47 // pred_region
        %s1091 = smul.u32 4, %s20
      $region52: #{simple_nn_forward.1} parent=47 // pred_fallthru
        _
    $region48: #{simple_nn_forward.1} parent=5 // pred_fallthru
      _
    %p1092 = scmp.le.s32.totalorder 2, %s15
    // Predicated region
    $region53: #{simple_nn_forward.1} parent=5 // pred_check
      %p1093 = pneg %p1092
    $region54: #{simple_nn_forward.1} parent=5 // pred_check_branch
      %1095 = sbr.rel (%p1093) target = $region56
    $region55: #{simple_nn_forward.1} parent=5 // pred_region
      %s1096 = ssub.s32 %s15, 2
      // Predicated region
      $region57: #{simple_nn_forward.1} parent=55 // pred_check
        %p1097 = pneg %p196
      $region58: #{simple_nn_forward.1} parent=55 // pred_check_branch
        %1099 = sbr.rel (%p1097) target = $region60
      $region59: #{simple_nn_forward.1} parent=55 // pred_region
        %s1100 = smul.u32 4, %s21
        %p1101 = scmp.lt.s32.totalorder %s1100, 7
        %s1102 = scalar_select %p1101, %s1100, 7
        %s1103 = scalar_lea.vmem %s7, %s1102
      $region60: #{simple_nn_forward.1} parent=55 // pred_fallthru
        _
    $region56: #{simple_nn_forward.1} parent=5 // pred_fallthru
      _
  $region6: #{simple_nn_forward.1} parent=0 // loop_footer
    %s19 = sadd.s32 1, %s15
  $region7: #{simple_nn_forward.1} parent=0 // loop_footer_branch
    %14 = sbr.rel target = $region3
  $region8: #{simple_nn_forward.1} parent=0 // loop_exit
    _

</llo_original>
